<compile_context>
chip_gen: v7x
topology: tpu7x:2x2x1
jax: 0.10.0
libtpu: 0.0.40
codegen_flags: <defaults>
</compile_context>

<pallas_src>
import jax
import jax.numpy as jnp
from jax.experimental import pallas as pl
from jax.experimental.pallas import tpu as pltpu


# ----------------------------------------------------------------------------
# Kernel: fused Linear(in,512) -> ReLU -> Linear(512,out_p) on one batch tile.
# ----------------------------------------------------------------------------
def mlp_kernel(x_ref, w1_ref, b1_ref, w2_ref, b2_ref, o_ref):
    # In-kernel f32 -> bf16 cast of the activation tile (VPU work hidden under
    # MXU / DMA; avoids a separate XLA cast kernel over x in HBM).
    x_bf = x_ref[...].astype(jnp.bfloat16)
    # First linear: bf16 operands, f32 accumulation on the MXU.
    h = jnp.dot(x_bf, w1_ref[...], preferred_element_type=jnp.float32)
    # Bias + ReLU epilogue in f32 (v5e has no bf16 VPU path), then keep the
    # (TILE_B, 512) hidden activation in bf16 -> halves intermediate traffic
    # and the second matmul's LHS bytes.
    h = jnp.maximum(h + b1_ref[...], 0.0).astype(jnp.bfloat16)
    # Second linear: bf16 operands, f32 accumulation.
    o = jnp.dot(h, w2_ref[...], preferred_element_type=jnp.float32)
    # Dropout(p=0.1) in eval mode == identity.
    o_ref[...] = (o + b2_ref[...]).astype(o_ref.dtype)


# ----------------------------------------------------------------------------
# One-time (cacheable) parameter preparation — hoisted out of the hot path.
# ----------------------------------------------------------------------------
def prepare_mlp_params(w1, b1, w2, b2):
    """w1: (in_features, 512), w2: (512, out_features) — transposed vs torch.
    Lane-pads out_features to a multiple of 128, casts matmul operands to
    bf16, reshapes biases to 2-D f32 rows. Returns (params_dict, out_features).
    """
    in_f, hidden = w1.shape
    out_f = w2.shape[1]
    out_p = ((out_f + 127) // 128) * 128
    if out_p != out_f:
        w2 = jnp.pad(w2, ((0, 0), (0, out_p - out_f)))
        b2 = jnp.pad(b2, (0, out_p - out_f))
    params = dict(
        w1=w1.astype(jnp.bfloat16),
        b1=b1.reshape(1, hidden).astype(jnp.float32),
        w2=w2.astype(jnp.bfloat16),
        b2=b2.reshape(1, out_p).astype(jnp.float32),
    )
    return params, out_f


# ----------------------------------------------------------------------------
# Forward pass.
# ----------------------------------------------------------------------------
def mlp_classifier_forward(x, params, out_f, *, tile_b_cap=2048,
                           keep_padded=False):
    """x: (B, in_features) f32. Returns (B, out_features) f32
    (or the (b_pad, out_p) padded slab if keep_padded=True)."""
    B, in_f = x.shape
    hidden = params["w1"].shape[1]
    out_p = params["w2"].shape[1]

    # ---- batch tiling ----
    # Multiples of 16 (bf16 packs 16 rows per vreg sublane group). Keep the
    # grid as short as possible (each step costs ~0.35 us of fixed pipeline
    # overhead), but split into >= 2 balanced tiles once B >= 32 so the
    # "parallel" axis actually uses both TensorCores on v7x.
    b16 = max(16, ((B + 15) // 16) * 16)
    if b16 >= 32:
        tile_b = min(tile_b_cap, ((b16 // 2 + 15) // 16) * 16)
    else:
        tile_b = b16
    tile_b = max(16, (tile_b // 16) * 16)
    b_pad = ((B + tile_b - 1) // tile_b) * tile_b
    if b_pad != B:
        x = jnp.pad(x, ((0, b_pad - B), (0, 0)))
    grid = (b_pad // tile_b,)

    # ---- compiler params: raise scoped VMEM only if the tile needs it ----
    vmem_est = (2 * tile_b * in_f * 4          # x tile (f32), double-buffered
                + 2 * tile_b * out_p * 4       # out tile (f32), double-buffered
                + tile_b * in_f * 2            # bf16 x copy
                + tile_b * hidden * (4 + 2)    # f32 + bf16 hidden intermediates
                + 2 * (in_f * hidden + hidden * out_p)  # bf16 weights
                + 4 * (hidden + out_p))        # f32 biases
    compiler_kwargs = dict(dimension_semantics=("parallel",))
    if vmem_est > 12 * 1024 * 1024:
        # v5e's default scoped VMEM is only 16 MiB; give the compiler headroom.
        compiler_kwargs["vmem_limit_bytes"] = int(
            min(2 * vmem_est, 56 * 1024 * 1024))

    cost = pl.CostEstimate(
        flops=2 * b_pad * (in_f * hidden + hidden * out_p),
        transcendentals=0,
        bytes_accessed=(b_pad * in_f * 4 + b_pad * out_p * 4
                        + 2 * (in_f * hidden + hidden * out_p)
                        + 4 * (hidden + out_p)),
    )

    out = pl.pallas_call(
        mlp_kernel,
        out_shape=jax.ShapeDtypeStruct((b_pad, out_p), jnp.float32),
        grid=grid,
        in_specs=[
            # x: one batch tile per grid step (stays f32; cast in-kernel)
            pl.BlockSpec((tile_b, in_f), lambda i: (i, 0)),
            # weights/biases: same block every step -> DMA once, VMEM-resident
            pl.BlockSpec((in_f, hidden), lambda i: (0, 0)),
            pl.BlockSpec((1, hidden), lambda i: (0, 0)),
            pl.BlockSpec((hidden, out_p), lambda i: (0, 0)),
            pl.BlockSpec((1, out_p), lambda i: (0, 0)),
        ],
        out_specs=pl.BlockSpec((tile_b, out_p), lambda i: (i, 0)),
        compiler_params=pltpu.CompilerParams(**compiler_kwargs),
        cost_estimate=cost,
    )(x, params["w1"], params["b1"], params["w2"], params["b2"])

    if keep_padded:
        return out          # padded columns are exact zeros; consumer may fuse
    return out[:B, :out_f]


# ----------------------------------------------------------------------------
# References.
# ----------------------------------------------------------------------------
def reference_forward_matched(x, w1, b1, w2, b2):
    """Same math as the kernel (bf16 operands + bf16 hidden, f32 accumulate)."""
    h = jnp.dot(x.astype(jnp.bfloat16), w1.astype(jnp.bfloat16),
                preferred_element_type=jnp.float32)
    h = jnp.maximum(h + b1.reshape(1, -1), 0.0).astype(jnp.bfloat16)
    o = jnp.dot(h, w2.astype(jnp.bfloat16), preferred_element_type=jnp.float32)
    return o + b2.reshape(1, -1)


def reference_forward_f32(x, w1, b1, w2, b2):
    h = jnp.maximum(x @ w1 + b1.reshape(1, -1), 0.0)
    return h @ w2 + b2.reshape(1, -1)


if __name__ == "__main__":
    # Small shapes consistent with the module: batch=8, in_features=32,
    # hidden=512 (fixed by the module), out_features=8.
    B, IN_F, HIDDEN, OUT_F = 8, 32, 512, 8

    key = jax.random.PRNGKey(0)
    kx, k1, kb1, k2, kb2 = jax.random.split(key, 5)

    x = jax.random.normal(kx, (B, IN_F), dtype=jnp.float32)
    # Deterministic synthetic params (shapes match nn.Linear(in,512)/(512,out),
    # stored transposed for the x @ W convention).
    w1 = jax.random.normal(k1, (IN_F, HIDDEN), dtype=jnp.float32) * (IN_F ** -0.5)
    b1 = jax.random.normal(kb1, (HIDDEN,), dtype=jnp.float32) * 0.01
    w2 = jax.random.normal(k2, (HIDDEN, OUT_F), dtype=jnp.float32) * (HIDDEN ** -0.5)
    b2 = jax.random.normal(kb2, (OUT_F,), dtype=jnp.float32) * 0.01

    # One-time weight prep (cache this in real use).
    params, out_f = prepare_mlp_params(w1, b1, w2, b2)

    # --- single-tile path (B=8) ---
    out = mlp_classifier_forward(x, params, out_f)
    out = jax.block_until_ready(out)
    assert out.shape == (B, OUT_F)

    ref_bf = reference_forward_matched(x, w1, b1, w2, b2)
    assert jnp.allclose(out, ref_bf, atol=2e-3, rtol=2e-3), "mismatch vs matched ref"
    ref_f32 = reference_forward_f32(x, w1, b1, w2, b2)
    assert jnp.allclose(out, ref_f32, atol=5e-2, rtol=5e-2), "mismatch vs f32 ref"

    # --- multi-tile path (grid >= 2, ragged batch) ---
    B2 = 50
    x2 = jax.random.normal(jax.random.PRNGKey(1), (B2, IN_F), dtype=jnp.float32)
    out2 = jax.block_until_ready(mlp_classifier_forward(x2, params, out_f))
    assert out2.shape == (B2, OUT_F)
    ref2 = reference_forward_matched(x2, w1, b1, w2, b2)
    assert jnp.allclose(out2, ref2, atol=2e-3, rtol=2e-3), "mismatch vs matched ref (multi-tile)"

    print("KERNEL_OK")
</pallas_src>

<mosaic_0001>
module attributes {stable_mosaic.version = 11 : i64} {
  func.func @mlp_kernel(%arg0: i32, %arg1: memref<16x32xf32, #tpu.memory_space<vmem>>, %arg2: memref<32x512xbf16, #tpu.memory_space<vmem>>, %arg3: memref<1x512xf32, #tpu.memory_space<vmem>>, %arg4: memref<512x128xbf16, #tpu.memory_space<vmem>>, %arg5: memref<1x128xf32, #tpu.memory_space<vmem>>, %arg6: memref<16x128xf32, #tpu.memory_space<vmem>>) attributes {dimension_semantics = [#tpu.dimension_semantics<parallel>], iteration_bounds = array<i64: 1>, scalar_prefetch = 0 : i64, scratch_operands = 0 : i64, tpu.core_type = #tpu.core_type<tc>, window_params = [{transform_indices = @transform_0, window_bounds = array<i64: 16, 32>}, {pipeline_mode = #tpu.pipeline_mode<synchronous>, transform_indices = @transform_1, window_bounds = array<i64: 32, 512>}, {pipeline_mode = #tpu.pipeline_mode<synchronous>, transform_indices = @transform_2, window_bounds = array<i64: 1, 512>}, {pipeline_mode = #tpu.pipeline_mode<synchronous>, transform_indices = @transform_3, window_bounds = array<i64: 512, 128>}, {pipeline_mode = #tpu.pipeline_mode<synchronous>, transform_indices = @transform_4, window_bounds = array<i64: 1, 128>}, {transform_indices = @transform_5, window_bounds = array<i64: 16, 128>}]} {
    %c0 = arith.constant 0 : index
    %c0_0 = arith.constant 0 : index
    %0 = vector.load %arg1[%c0, %c0_0] : memref<16x32xf32, #tpu.memory_space<vmem>>, vector<16x32xf32>
    %1 = arith.truncf %0 : vector<16x32xf32> to vector<16x32xbf16>
    %c0_1 = arith.constant 0 : index
    %c0_2 = arith.constant 0 : index
    %2 = vector.load %arg2[%c0_1, %c0_2] : memref<32x512xbf16, #tpu.memory_space<vmem>>, vector<32x512xbf16>
    %cst = arith.constant dense<0.000000e+00> : vector<16x512xf32>
    %3 = tpu.matmul %1, %2, %cst {dimension_numbers = #tpu.dot_dimension_numbers<[1], [0], [0], [1], [0, 0, 1, 1], [], []>} : vector<16x32xbf16>, vector<32x512xbf16>, vector<16x512xf32> -> vector<16x512xf32>
    %c0_3 = arith.constant 0 : index
    %c0_4 = arith.constant 0 : index
    %4 = vector.load %arg3[%c0_3, %c0_4] : memref<1x512xf32, #tpu.memory_space<vmem>>, vector<1x512xf32>
    %5 = vector.broadcast %4 : vector<1x512xf32> to vector<16x512xf32>
    %6 = arith.addf %3, %5 : vector<16x512xf32>
    %cst_5 = arith.constant 0.000000e+00 : f32
    %7 = vector.broadcast %cst_5 : f32 to vector<16x512xf32>
    %8 = arith.maximumf %6, %7 : vector<16x512xf32>
    %9 = arith.truncf %8 : vector<16x512xf32> to vector<16x512xbf16>
    %c0_6 = arith.constant 0 : index
    %c0_7 = arith.constant 0 : index
    %10 = vector.load %arg4[%c0_6, %c0_7] : memref<512x128xbf16, #tpu.memory_space<vmem>>, vector<512x128xbf16>
    %cst_8 = arith.constant dense<0.000000e+00> : vector<16x128xf32>
    %11 = tpu.matmul %9, %10, %cst_8 {dimension_numbers = #tpu.dot_dimension_numbers<[1], [0], [0], [1], [0, 0, 1, 1], [], []>} : vector<16x512xbf16>, vector<512x128xbf16>, vector<16x128xf32> -> vector<16x128xf32>
    %c0_9 = arith.constant 0 : index
    %c0_10 = arith.constant 0 : index
    %12 = vector.load %arg5[%c0_9, %c0_10] : memref<1x128xf32, #tpu.memory_space<vmem>>, vector<1x128xf32>
    %13 = vector.broadcast %12 : vector<1x128xf32> to vector<16x128xf32>
    %14 = arith.addf %11, %13 : vector<16x128xf32>
    %c0_11 = arith.constant 0 : index
    %c0_12 = arith.constant 0 : index
    %15 = vector.load %arg6[%c0_11, %c0_12] : memref<16x128xf32, #tpu.memory_space<vmem>>, vector<16x128xf32>
    tpu.vector_store %arg6[%c0_11, %c0_12], %14 {strides = array<i32>} : memref<16x128xf32, #tpu.memory_space<vmem>>, vector<16x128xf32>,
    return
  }
  func.func @transform_0(%arg0: i32) -> (i32, i32) {
    %c0_i32 = arith.constant 0 : i32
    %c0_i32_0 = arith.constant 0 : i32
    return %arg0, %c0_i32 : i32, i32
  }
  func.func @transform_1(%arg0: i32) -> (i32, i32) {
    %c0_i32 = arith.constant 0 : i32
    %c0_i32_0 = arith.constant 0 : i32
    %c0_i32_1 = arith.constant 0 : i32
    return %c0_i32, %c0_i32_0 : i32, i32
  }
  func.func @transform_2(%arg0: i32) -> (i32, i32) {
    %c0_i32 = arith.constant 0 : i32
    %c0_i32_0 = arith.constant 0 : i32
    %c0_i32_1 = arith.constant 0 : i32
    return %c0_i32, %c0_i32_0 : i32, i32
  }
  func.func @transform_3(%arg0: i32) -> (i32, i32) {
    %c0_i32 = arith.constant 0 : i32
    %c0_i32_0 = arith.constant 0 : i32
    %c0_i32_1 = arith.constant 0 : i32
    return %c0_i32, %c0_i32_0 : i32, i32
  }
  func.func @transform_4(%arg0: i32) -> (i32, i32) {
    %c0_i32 = arith.constant 0 : i32
    %c0_i32_0 = arith.constant 0 : i32
    %c0_i32_1 = arith.constant 0 : i32
    return %c0_i32, %c0_i32_0 : i32, i32
  }
  func.func @transform_5(%arg0: i32) -> (i32, i32) {
    %c0_i32 = arith.constant 0 : i32
    %c0_i32_0 = arith.constant 0 : i32
    return %arg0, %c0_i32 : i32, i32
  }
}

</mosaic_0001>

<llo_original>
// kernel: tpu_custom_call.1
$region0: #{tpu_custom_call.1}
  #allocation0 [shape = 'u32[]', space=smem, size = 0x4, offset = 0x4, fixed_abs, tag = 'smem constant byte address 0x4 - core index']
  #allocation1 [shape = 'u32[144,128]{1,0:T(1,128)}', space=vmem, size = 0x12000, scoped, tag = 'internal scratch']
  %s0 = inlined_call_operand.hbm [shape: f32[16,32], index: 0, kind: input, shape index: {}]
  %s1 = inlined_call_operand.hbm [shape: bf16[32,512], index: 1, kind: input, shape index: {}]
  %s2 = inlined_call_operand.vmem [shape: f32[1,512], index: 2, kind: input, shape index: {}]
  %s3 = inlined_call_operand.hbm [shape: bf16[512,128], index: 3, kind: input, shape index: {}]
  %s4 = inlined_call_operand.vmem [shape: f32[1,128], index: 4, kind: input, shape index: {}]
  %s5 = inlined_call_operand.hbm [shape: f32[16,128], index: 5, kind: output, shape index: {}]
  %s6 = sld [smem:[#allocation0]]
  $region42: #{tpu_custom_call.1} parent=0
    _
  %s8 = ssub.s32 1, %s6
  %s9 = scalar_select 0, %s8, %s6
  $region1: #{tpu_custom_call.1} parent=0
    #allocation2 [shape = 'u8[8192]{0}', space=vmem, size = 0x2000, scoped, tag = 'input window, operand 0, single buffered']
    #allocation3 [shape = 's32[1]{0}', space=sflag, size = 0x4, scoped, tag = 'scoped memory for tpu_custom_call.1']
    #allocation4 [shape = 's32[1]{0}', space=sflag, size = 0x4, scoped, tag = 'scoped memory for tpu_custom_call.1']
    #allocation5 [shape = 'u8[32768]{0}', space=vmem, size = 0x8000, scoped, tag = 'input window, operand 1, single buffered']
    #allocation6 [shape = 's32[1]{0}', space=sflag, size = 0x4, scoped, tag = 'scoped memory for tpu_custom_call.1']
    #allocation7 [shape = 'u8[131072]{0}', space=vmem, size = 0x20000, scoped, tag = 'input window, operand 3, single buffered']
    #allocation8 [shape = 'u8[8192]{0}', space=vmem, size = 0x2000, scoped, tag = 'output window, operand 0, single buffered']
    %10 = vsyncpa [#allocation3], 0
    %11 = vsyncpa [#allocation6], 0
    %12 = vsyncpa [#allocation4], 0
    // Predicated region
    $region2: #{tpu_custom_call.1} parent=1 // pred_check
      _
    $region3: #{tpu_custom_call.1} parent=1 // pred_check_branch
      %14 = sbr.rel (0) target = $region5
    $region4: #{tpu_custom_call.1} parent=1 // pred_region
      %s16 = ssub.s32 256, 256
      %17 = vsyncadd [#allocation3], %s16
      %s18 = sshll.u32 [#allocation2], 4
      %s19 = int_to_ptr.vmem [resolvable:$true] %s18
      %24 = dma.hbm_to_vmem [thread:$0]  %s0, 256, %s19, [#allocation3], 128, 128, 8
    $region5: #{tpu_custom_call.1} parent=1 // pred_fallthru
      _
    // Predicated region
    $region6: #{tpu_custom_call.1} parent=1 // pred_check
      _
    $region7: #{tpu_custom_call.1} parent=1 // pred_check_branch
      %26 = sbr.rel (0) target = $region9
    $region8: #{tpu_custom_call.1} parent=1 // pred_region
      %s28 = ssub.s32 1024, 1024
      %29 = vsyncadd [#allocation6], %s28
      %s30 = sshll.u32 [#allocation5], 4
      %s31 = int_to_ptr.vmem [resolvable:$true] %s30
      %36 = dma.hbm_to_vmem [thread:$0]  %s1, 1024, %s31, [#allocation6], 256, 256, 16
    $region9: #{tpu_custom_call.1} parent=1 // pred_fallthru
      _
    // Predicated region
    $region10: #{tpu_custom_call.1} parent=1 // pred_check
      _
    $region11: #{tpu_custom_call.1} parent=1 // pred_check_branch
      %38 = sbr.rel (0) target = $region13
    $region12: #{tpu_custom_call.1} parent=1 // pred_region
      _
    $region13: #{tpu_custom_call.1} parent=1 // pred_fallthru
      _
    // Predicated region
    $region14: #{tpu_custom_call.1} parent=1 // pred_check
      _
    $region15: #{tpu_custom_call.1} parent=1 // pred_check_branch
      %40 = sbr.rel (0) target = $region17
    $region16: #{tpu_custom_call.1} parent=1 // pred_region
      %s42 = ssub.s32 4096, 4096
      %43 = vsyncadd [#allocation6], %s42
      %s44 = sshll.u32 [#allocation7], 4
      %s45 = int_to_ptr.vmem [resolvable:$true] %s44
      %50 = dma.hbm_to_vmem [thread:$0]  %s3, 4096, %s45, [#allocation6], 64, 64, 4
    $region17: #{tpu_custom_call.1} parent=1 // pred_fallthru
      _
    // Predicated region
    $region18: #{tpu_custom_call.1} parent=1 // pred_check
      _
    $region19: #{tpu_custom_call.1} parent=1 // pred_check_branch
      %52 = sbr.rel (0) target = $region21
    $region20: #{tpu_custom_call.1} parent=1 // pred_region
      _
    $region21: #{tpu_custom_call.1} parent=1 // pred_fallthru
      _
    // Predicated region
    $region22: #{tpu_custom_call.1} parent=1 // pred_check
      _
    $region23: #{tpu_custom_call.1} parent=1 // pred_check_branch
      %54 = sbr.rel (0) target = $region25
    $region24: #{tpu_custom_call.1} parent=1 // pred_region
      %55 = dma.done [#allocation3], 256
    $region25: #{tpu_custom_call.1} parent=1 // pred_fallthru
      _
    // Predicated region
    $region26: #{tpu_custom_call.1} parent=1 // pred_check
      _
    $region27: #{tpu_custom_call.1} parent=1 // pred_check_branch
      %57 = sbr.rel (0) target = $region29
    $region28: #{tpu_custom_call.1} parent=1 // pred_region
      %58 = dma.done [#allocation6], 1024
    $region29: #{tpu_custom_call.1} parent=1 // pred_fallthru
      _
    // Predicated region
    $region30: #{tpu_custom_call.1} parent=1 // pred_check
      _
    $region31: #{tpu_custom_call.1} parent=1 // pred_check_branch
      %60 = sbr.rel (0) target = $region33
    $region32: #{tpu_custom_call.1} parent=1 // pred_region
      %61 = dma.done [#allocation6], 4096
    $region33: #{tpu_custom_call.1} parent=1 // pred_fallthru
      _
    %v63 = vld [vmem:[#allocation2] sm:$0xff]
    %v64 = vld [vmem:[#allocation2 + $0x8] sm:$0xff]
    %v65 = vpack.c.bf16 %v64, %v63
    %v66 = vld [vmem:[#allocation5] sm:$0xff]
    %v67 = vld [vmem:[#allocation5 + $0x8] sm:$0xff]
    %v68 = vld [vmem:[#allocation5 + $0x10] sm:$0xff]
    %v69 = vld [vmem:[#allocation5 + $0x18] sm:$0xff]
    %v70 = vld [vmem:[#allocation5 + $0x20] sm:$0xff]
    %v71 = vld [vmem:[#allocation5 + $0x28] sm:$0xff]
    %v72 = vld [vmem:[#allocation5 + $0x30] sm:$0xff]
    %v73 = vld [vmem:[#allocation5 + $0x38] sm:$0xff]
    %v74 = vld [vmem:[%s2] sm:$0xf]
    %v76 = vlaneseq
    %v77 = vshrl.u32 %v76, 7
    %v78 = vsub.s32 0, %v77
    %v79 = vrot.slane %v74, %v78
    %v80 = vlaneseq
    %v81 = vshrl.u32 %v80, 7
    %v82 = vsub.s32 1, %v81
    %v83 = vrot.slane %v74, %v82
    %v84 = vlaneseq
    %v85 = vshrl.u32 %v84, 7
    %v86 = vsub.s32 2, %v85
    %v87 = vrot.slane %v74, %v86
    %v88 = vlaneseq
    %v89 = vshrl.u32 %v88, 7
    %v90 = vsub.s32 3, %v89
    %v91 = vrot.slane %v74, %v90
    %v104 = vunpack.c.l.b16 %v66
    %v105 = vunpack.c.h.b16 %v66
    %v106 = vunpack.c.l.b16 %v67
    %v107 = vunpack.c.h.b16 %v67
    %v108 = vunpack.c.l.b16 %v68
    %v109 = vunpack.c.h.b16 %v68
    %v110 = vunpack.c.l.b16 %v69
    %v111 = vunpack.c.h.b16 %v69
    %v112 = vunpack.c.l.b16 %v70
    %v113 = vunpack.c.h.b16 %v70
    %v114 = vunpack.c.l.b16 %v71
    %v115 = vunpack.c.h.b16 %v71
    %v116 = vunpack.c.l.b16 %v72
    %v117 = vunpack.c.h.b16 %v72
    %v118 = vunpack.c.l.b16 %v73
    %v119 = vunpack.c.h.b16 %v73
    %v120 = vpack.c.b16 %v108, %v104
    %v121 = vpack.c.b16 %v109, %v105
    %v122 = vpack.c.b16 %v110, %v106
    %v123 = vpack.c.b16 %v111, %v107
    %v124 = vpack.c.b16 %v116, %v112
    %v125 = vpack.c.b16 %v117, %v113
    %v126 = vpack.c.b16 %v118, %v114
    %v127 = vpack.c.b16 %v119, %v115
    %vm136 = vcmask 261120
    %v138 = vsel %vm136, %v65, 0
    %140 = vmatprep.subr.bf16.mxu0 %v121
    %141 = vmatpush1.bf16.msra.mxu0 %v120
    %142 = vmatprep.subr.bf16.mxu0 %v125
    %143 = vmatpush1.bf16.msra.mxu0 %v124
    %144 = vmatprep.subr.bf16.mxu0 0
    %145 = vmatpush1.bf16.msra.mxu0 0
    %146 = vmatprep.subr.bf16.mxu0 0
    %147 = vmatpush1.bf16.msra.mxu0 0
    %148 = vmatprep.subr.bf16.mxu0 0
    %149 = vmatpush1.bf16.msra.mxu0 0
    %150 = vmatprep.subr.bf16.mxu0 0
    %151 = vmatpush1.bf16.msra.mxu0 0
    %152 = vmatprep.subr.bf16.mxu0 0
    %153 = vmatpush1.bf16.msra.mxu0 0
    %154 = vmatprep.subr.bf16.mxu0 0
    %155 = vmatpush1.bf16.msra.mxu0 0
    %156 = vmatprep.subr.bf16.mxu0 0
    %157 = vmatpush1.bf16.msra.mxu0 0
    %158 = vmatprep.subr.bf16.mxu0 0
    %159 = vmatpush1.bf16.msra.mxu0 0
    %160 = vmatprep.subr.bf16.mxu0 0
    %161 = vmatpush1.bf16.msra.mxu0 0
    %162 = vmatprep.subr.bf16.mxu0 0
    %163 = vmatpush1.bf16.msra.mxu0 0
    %164 = vmatprep.subr.bf16.mxu0 0
    %165 = vmatpush1.bf16.msra.mxu0 0
    %166 = vmatprep.subr.bf16.mxu0 0
    %167 = vmatpush1.bf16.msra.mxu0 0
    %168 = vmatprep.subr.bf16.mxu0 0
    %169 = vmatpush1.bf16.msra.mxu0 0
    %170 = vmatprep.subr.bf16.mxu0 0
    %171 = vmatpush1.bf16.msra.mxu0 0
    %172 = vmatprep.mubr.bf16.mxu0 0
    %173 = vmatmul.mubr.bf16.gmra.mrb[0].mxu0 %v138
    %v174 = vpop.f32.mrb[0].mxu0
    %v175 = vadd.f32 %v79, %v174
    %v176 = vpop.f32.mrb[0].mxu0
    %v177 = vadd.f32 %v83, %v176
    %v178 = vpop.f32.mrb[0].mxu0
    %v179 = vadd.f32 %v79, %v178
    %v180 = vpop.f32.mrb[0].mxu0
    %v181 = vadd.f32 %v83, %v180
    %182 = vdwg.mxu0
    %183 = vmatprep.subr.bf16.mxu0 %v123
    %184 = vmatpush1.bf16.msra.mxu0 %v122
    %185 = vmatprep.subr.bf16.mxu0 %v127
    %186 = vmatpush1.bf16.msra.mxu0 %v126
    %187 = vmatprep.subr.bf16.mxu0 0
    %188 = vmatpush1.bf16.msra.mxu0 0
    %189 = vmatprep.subr.bf16.mxu0 0
    %190 = vmatpush1.bf16.msra.mxu0 0
    %191 = vmatprep.subr.bf16.mxu0 0
    %192 = vmatpush1.bf16.msra.mxu0 0
    %193 = vmatprep.subr.bf16.mxu0 0
    %194 = vmatpush1.bf16.msra.mxu0 0
    %195 = vmatprep.subr.bf16.mxu0 0
    %196 = vmatpush1.bf16.msra.mxu0 0
    %197 = vmatprep.subr.bf16.mxu0 0
    %198 = vmatpush1.bf16.msra.mxu0 0
    %199 = vmatprep.subr.bf16.mxu0 0
    %200 = vmatpush1.bf16.msra.mxu0 0
    %201 = vmatprep.subr.bf16.mxu0 0
    %202 = vmatpush1.bf16.msra.mxu0 0
    %203 = vmatprep.subr.bf16.mxu0 0
    %204 = vmatpush1.bf16.msra.mxu0 0
    %205 = vmatprep.subr.bf16.mxu0 0
    %206 = vmatpush1.bf16.msra.mxu0 0
    %207 = vmatprep.subr.bf16.mxu0 0
    %208 = vmatpush1.bf16.msra.mxu0 0
    %209 = vmatprep.subr.bf16.mxu0 0
    %210 = vmatpush1.bf16.msra.mxu0 0
    %211 = vmatprep.subr.bf16.mxu0 0
    %212 = vmatpush1.bf16.msra.mxu0 0
    %213 = vmatprep.subr.bf16.mxu0 0
    %214 = vmatpush1.bf16.msra.mxu0 0
    %215 = vmatprep.mubr.bf16.mxu0 0
    %216 = vmatmul.mubr.bf16.gmra.mrb[0].mxu0 %v138
    %v217 = vpop.f32.mrb[0].mxu0
    %v218 = vadd.f32 %v87, %v217
    %v219 = vpop.f32.mrb[0].mxu0
    %v220 = vadd.f32 %v91, %v219
    %v221 = vpop.f32.mrb[0].mxu0
    %v222 = vadd.f32 %v87, %v221
    %v223 = vpop.f32.mrb[0].mxu0
    %v224 = vadd.f32 %v91, %v223
    %225 = vdwg.mxu0
    %v226 = vmax.f32 %v175, 0.0
    %v227 = vmax.f32 %v177, 0.0
    %v228 = vmax.f32 %v218, 0.0
    %v229 = vmax.f32 %v220, 0.0
    %v230 = vmax.f32 %v179, 0.0
    %v231 = vmax.f32 %v181, 0.0
    %v232 = vmax.f32 %v222, 0.0
    %v233 = vmax.f32 %v224, 0.0
    %v234 = vpack.c.bf16 %v230, %v226
    %v235 = vpack.c.bf16 %v231, %v227
    %v236 = vpack.c.bf16 %v232, %v228
    %v237 = vpack.c.bf16 %v233, %v229
    %v238 = vld [vmem:[#allocation7] sm:$0xf]
    %v239 = vld [vmem:[#allocation7 + $0x4] sm:$0xf]
    %v240 = vld [vmem:[#allocation7 + $0x8] sm:$0xf]
    %v241 = vld [vmem:[#allocation7 + $0xc] sm:$0xf]
    %v242 = vld [vmem:[#allocation7 + $0x10] sm:$0xf]
    %v243 = vld [vmem:[#allocation7 + $0x14] sm:$0xf]
    %v244 = vld [vmem:[#allocation7 + $0x18] sm:$0xf]
    %v245 = vld [vmem:[#allocation7 + $0x1c] sm:$0xf]
    %v246 = vld [vmem:[#allocation7 + $0x20] sm:$0xf]
    %v247 = vld [vmem:[#allocation7 + $0x24] sm:$0xf]
    %v248 = vld [vmem:[#allocation7 + $0x28] sm:$0xf]
    %v249 = vld [vmem:[#allocation7 + $0x2c] sm:$0xf]
    %v250 = vld [vmem:[#allocation7 + $0x30] sm:$0xf]
    %v251 = vld [vmem:[#allocation7 + $0x34] sm:$0xf]
    %v252 = vld [vmem:[#allocation7 + $0x38] sm:$0xf]
    %v253 = vld [vmem:[#allocation7 + $0x3c] sm:$0xf]
    %v254 = vld [vmem:[#allocation7 + $0x40] sm:$0xf]
    %v255 = vld [vmem:[#allocation7 + $0x44] sm:$0xf]
    %v256 = vld [vmem:[#allocation7 + $0x48] sm:$0xf]
    %v257 = vld [vmem:[#allocation7 + $0x4c] sm:$0xf]
    %v258 = vld [vmem:[#allocation7 + $0x50] sm:$0xf]
    %v259 = vld [vmem:[#allocation7 + $0x54] sm:$0xf]
    %v260 = vld [vmem:[#allocation7 + $0x58] sm:$0xf]
    %v261 = vld [vmem:[#allocation7 + $0x5c] sm:$0xf]
    %v262 = vld [vmem:[#allocation7 + $0x60] sm:$0xf]
    %v263 = vld [vmem:[#allocation7 + $0x64] sm:$0xf]
    %v264 = vld [vmem:[#allocation7 + $0x68] sm:$0xf]
    %v265 = vld [vmem:[#allocation7 + $0x6c] sm:$0xf]
    %v266 = vld [vmem:[#allocation7 + $0x70] sm:$0xf]
    %v267 = vld [vmem:[#allocation7 + $0x74] sm:$0xf]
    %v268 = vld [vmem:[#allocation7 + $0x78] sm:$0xf]
    %v269 = vld [vmem:[#allocation7 + $0x7c] sm:$0xf]
    %v270 = vld [vmem:[#allocation7 + $0x80] sm:$0xf]
    %v271 = vld [vmem:[#allocation7 + $0x84] sm:$0xf]
    %v272 = vld [vmem:[#allocation7 + $0x88] sm:$0xf]
    %v273 = vld [vmem:[#allocation7 + $0x8c] sm:$0xf]
    %v274 = vld [vmem:[#allocation7 + $0x90] sm:$0xf]
    %v275 = vld [vmem:[#allocation7 + $0x94] sm:$0xf]
    %v276 = vld [vmem:[#allocation7 + $0x98] sm:$0xf]
    %v277 = vld [vmem:[#allocation7 + $0x9c] sm:$0xf]
    %v278 = vld [vmem:[#allocation7 + $0xa0] sm:$0xf]
    %v279 = vld [vmem:[#allocation7 + $0xa4] sm:$0xf]
    %v280 = vld [vmem:[#allocation7 + $0xa8] sm:$0xf]
    %v281 = vld [vmem:[#allocation7 + $0xac] sm:$0xf]
    %v282 = vld [vmem:[#allocation7 + $0xb0] sm:$0xf]
    %v283 = vld [vmem:[#allocation7 + $0xb4] sm:$0xf]
    %v284 = vld [vmem:[#allocation7 + $0xb8] sm:$0xf]
    %v285 = vld [vmem:[#allocation7 + $0xbc] sm:$0xf]
    %v286 = vld [vmem:[#allocation7 + $0xc0] sm:$0xf]
    %v287 = vld [vmem:[#allocation7 + $0xc4] sm:$0xf]
    %v288 = vld [vmem:[#allocation7 + $0xc8] sm:$0xf]
    %v289 = vld [vmem:[#allocation7 + $0xcc] sm:$0xf]
    %v290 = vld [vmem:[#allocation7 + $0xd0] sm:$0xf]
    %v291 = vld [vmem:[#allocation7 + $0xd4] sm:$0xf]
    %v292 = vld [vmem:[#allocation7 + $0xd8] sm:$0xf]
    %v293 = vld [vmem:[#allocation7 + $0xdc] sm:$0xf]
    %v294 = vld [vmem:[#allocation7 + $0xe0] sm:$0xf]
    %v295 = vld [vmem:[#allocation7 + $0xe4] sm:$0xf]
    %v296 = vld [vmem:[#allocation7 + $0xe8] sm:$0xf]
    %v297 = vld [vmem:[#allocation7 + $0xec] sm:$0xf]
    %v298 = vld [vmem:[#allocation7 + $0xf0] sm:$0xf]
    %v299 = vld [vmem:[#allocation7 + $0xf4] sm:$0xf]
    %v300 = vld [vmem:[#allocation7 + $0xf8] sm:$0xf]
    %v301 = vld [vmem:[#allocation7 + $0xfc] sm:$0xf]
    %v302 = vld [vmem:[%s4] sm:$0x1]
    %v304 = vlaneseq
    %v305 = vshrl.u32 %v304, 7
    %v306 = vsub.s32 0, %v305
    %v307 = vrot.slane %v302, %v306
    %v373 = vunpack.c.l.b16 %v238
    %v374 = vunpack.c.l.b16 %v239
    %v375 = vunpack.c.l.b16 %v240
    %v376 = vunpack.c.l.b16 %v241
    %v377 = vunpack.c.l.b16 %v242
    %v378 = vunpack.c.l.b16 %v243
    %v379 = vunpack.c.l.b16 %v244
    %v380 = vunpack.c.l.b16 %v245
    %v381 = vunpack.c.l.b16 %v246
    %v382 = vunpack.c.l.b16 %v247
    %v383 = vunpack.c.l.b16 %v248
    %v384 = vunpack.c.l.b16 %v249
    %v385 = vunpack.c.l.b16 %v250
    %v386 = vunpack.c.l.b16 %v251
    %v387 = vunpack.c.l.b16 %v252
    %v388 = vunpack.c.l.b16 %v253
    %v389 = vunpack.c.l.b16 %v254
    %v390 = vunpack.c.l.b16 %v255
    %v391 = vunpack.c.l.b16 %v256
    %v392 = vunpack.c.l.b16 %v257
    %v393 = vunpack.c.l.b16 %v258
    %v394 = vunpack.c.l.b16 %v259
    %v395 = vunpack.c.l.b16 %v260
    %v396 = vunpack.c.l.b16 %v261
    %v397 = vunpack.c.l.b16 %v262
    %v398 = vunpack.c.l.b16 %v263
    %v399 = vunpack.c.l.b16 %v264
    %v400 = vunpack.c.l.b16 %v265
    %v401 = vunpack.c.l.b16 %v266
    %v402 = vunpack.c.l.b16 %v267
    %v403 = vunpack.c.l.b16 %v268
    %v404 = vunpack.c.l.b16 %v269
    %v405 = vunpack.c.l.b16 %v270
    %v406 = vunpack.c.l.b16 %v271
    %v407 = vunpack.c.l.b16 %v272
    %v408 = vunpack.c.l.b16 %v273
    %v409 = vunpack.c.l.b16 %v274
    %v410 = vunpack.c.l.b16 %v275
    %v411 = vunpack.c.l.b16 %v276
    %v412 = vunpack.c.l.b16 %v277
    %v413 = vunpack.c.l.b16 %v278
    %v414 = vunpack.c.l.b16 %v279
    %v415 = vunpack.c.l.b16 %v280
    %v416 = vunpack.c.l.b16 %v281
    %v417 = vunpack.c.l.b16 %v282
    %v418 = vunpack.c.l.b16 %v283
    %v419 = vunpack.c.l.b16 %v284
    %v420 = vunpack.c.l.b16 %v285
    %v421 = vunpack.c.l.b16 %v286
    %v422 = vunpack.c.l.b16 %v287
    %v423 = vunpack.c.l.b16 %v288
    %v424 = vunpack.c.l.b16 %v289
    %v425 = vunpack.c.l.b16 %v290
    %v426 = vunpack.c.l.b16 %v291
    %v427 = vunpack.c.l.b16 %v292
    %v428 = vunpack.c.l.b16 %v293
    %v429 = vunpack.c.l.b16 %v294
    %v430 = vunpack.c.l.b16 %v295
    %v431 = vunpack.c.l.b16 %v296
    %v432 = vunpack.c.l.b16 %v297
    %v433 = vunpack.c.l.b16 %v298
    %v434 = vunpack.c.l.b16 %v299
    %v435 = vunpack.c.l.b16 %v300
    %v436 = vunpack.c.l.b16 %v301
    %v437 = vpack.c.b16 %v374, %v373
    %v438 = vpack.c.b16 %v376, %v375
    %v439 = vpack.c.b16 %v378, %v377
    %v440 = vpack.c.b16 %v380, %v379
    %v441 = vpack.c.b16 %v382, %v381
    %v442 = vpack.c.b16 %v384, %v383
    %v443 = vpack.c.b16 %v386, %v385
    %v444 = vpack.c.b16 %v388, %v387
    %v445 = vpack.c.b16 %v390, %v389
    %v446 = vpack.c.b16 %v392, %v391
    %v447 = vpack.c.b16 %v394, %v393
    %v448 = vpack.c.b16 %v396, %v395
    %v449 = vpack.c.b16 %v398, %v397
    %v450 = vpack.c.b16 %v400, %v399
    %v451 = vpack.c.b16 %v402, %v401
    %v452 = vpack.c.b16 %v404, %v403
    %v453 = vpack.c.b16 %v406, %v405
    %v454 = vpack.c.b16 %v408, %v407
    %v455 = vpack.c.b16 %v410, %v409
    %v456 = vpack.c.b16 %v412, %v411
    %v457 = vpack.c.b16 %v414, %v413
    %v458 = vpack.c.b16 %v416, %v415
    %v459 = vpack.c.b16 %v418, %v417
    %v460 = vpack.c.b16 %v420, %v419
    %v461 = vpack.c.b16 %v422, %v421
    %v462 = vpack.c.b16 %v424, %v423
    %v463 = vpack.c.b16 %v426, %v425
    %v464 = vpack.c.b16 %v428, %v427
    %v465 = vpack.c.b16 %v430, %v429
    %v466 = vpack.c.b16 %v432, %v431
    %v467 = vpack.c.b16 %v434, %v433
    %v468 = vpack.c.b16 %v436, %v435
    %501 = vmatprep.subr.bf16.mxu0 0
    %502 = vmatpush1.bf16.msra.mxu0 %v437
    %503 = vmatprep.subr.bf16.mxu0 0
    %504 = vmatpush1.bf16.msra.mxu0 %v438
    %505 = vmatprep.subr.bf16.mxu0 0
    %506 = vmatpush1.bf16.msra.mxu0 %v439
    %507 = vmatprep.subr.bf16.mxu0 0
    %508 = vmatpush1.bf16.msra.mxu0 %v440
    %509 = vmatprep.subr.bf16.mxu0 0
    %510 = vmatpush1.bf16.msra.mxu0 %v441
    %511 = vmatprep.subr.bf16.mxu0 0
    %512 = vmatpush1.bf16.msra.mxu0 %v442
    %513 = vmatprep.subr.bf16.mxu0 0
    %514 = vmatpush1.bf16.msra.mxu0 %v443
    %515 = vmatprep.subr.bf16.mxu0 0
    %516 = vmatpush1.bf16.msra.mxu0 %v444
    %517 = vmatprep.subr.bf16.mxu0 0
    %518 = vmatpush1.bf16.msra.mxu0 %v445
    %519 = vmatprep.subr.bf16.mxu0 0
    %520 = vmatpush1.bf16.msra.mxu0 %v446
    %521 = vmatprep.subr.bf16.mxu0 0
    %522 = vmatpush1.bf16.msra.mxu0 %v447
    %523 = vmatprep.subr.bf16.mxu0 0
    %524 = vmatpush1.bf16.msra.mxu0 %v448
    %525 = vmatprep.subr.bf16.mxu0 0
    %526 = vmatpush1.bf16.msra.mxu0 %v449
    %527 = vmatprep.subr.bf16.mxu0 0
    %528 = vmatpush1.bf16.msra.mxu0 %v450
    %529 = vmatprep.subr.bf16.mxu0 0
    %530 = vmatpush1.bf16.msra.mxu0 %v451
    %531 = vmatprep.subr.bf16.mxu0 0
    %532 = vmatpush1.bf16.msra.mxu0 %v452
    %533 = vmatprep.mubr.bf16.mxu0 %v235
    %534 = vmatmul.mubr.bf16.gmra.mrb[0].mxu0 %v234
    %v535 = vpop.f32.mrb[0].mxu0
    %v536 = vadd.f32 %v307, %v535
    %v537 = vpop.f32.mrb[0].mxu0
    %v538 = vpop.f32.mrb[0].mxu0
    %v539 = vadd.f32 %v307, %v538
    %v540 = vpop.f32.mrb[0].mxu0
    %541 = vdwg.mxu0
    %542 = vmatprep.subr.bf16.mxu0 0
    %543 = vmatpush1.bf16.msra.mxu0 %v453
    %544 = vmatprep.subr.bf16.mxu0 0
    %545 = vmatpush1.bf16.msra.mxu0 %v454
    %546 = vmatprep.subr.bf16.mxu0 0
    %547 = vmatpush1.bf16.msra.mxu0 %v455
    %548 = vmatprep.subr.bf16.mxu0 0
    %549 = vmatpush1.bf16.msra.mxu0 %v456
    %550 = vmatprep.subr.bf16.mxu0 0
    %551 = vmatpush1.bf16.msra.mxu0 %v457
    %552 = vmatprep.subr.bf16.mxu0 0
    %553 = vmatpush1.bf16.msra.mxu0 %v458
    %554 = vmatprep.subr.bf16.mxu0 0
    %555 = vmatpush1.bf16.msra.mxu0 %v459
    %556 = vmatprep.subr.bf16.mxu0 0
    %557 = vmatpush1.bf16.msra.mxu0 %v460
    %558 = vmatprep.subr.bf16.mxu0 0
    %559 = vmatpush1.bf16.msra.mxu0 %v461
    %560 = vmatprep.subr.bf16.mxu0 0
    %561 = vmatpush1.bf16.msra.mxu0 %v462
    %562 = vmatprep.subr.bf16.mxu0 0
    %563 = vmatpush1.bf16.msra.mxu0 %v463
    %564 = vmatprep.subr.bf16.mxu0 0
    %565 = vmatpush1.bf16.msra.mxu0 %v464
    %566 = vmatprep.subr.bf16.mxu0 0
    %567 = vmatpush1.bf16.msra.mxu0 %v465
    %568 = vmatprep.subr.bf16.mxu0 0
    %569 = vmatpush1.bf16.msra.mxu0 %v466
    %570 = vmatprep.subr.bf16.mxu0 0
    %571 = vmatpush1.bf16.msra.mxu0 %v467
    %572 = vmatprep.subr.bf16.mxu0 0
    %573 = vmatpush1.bf16.msra.mxu0 %v468
    %574 = vmatprep.mubr.bf16.mxu0 %v237
    %575 = vmatmul.mubr.bf16.gmra.mrb[0].mxu0 %v236
    %v576 = vpop.f32.mrb[0].mxu0
    %v577 = vadd.f32 %v536, %v576
    %v578 = vpop.f32.mrb[0].mxu0
    %v579 = vpop.f32.mrb[0].mxu0
    %v580 = vadd.f32 %v539, %v579
    %v581 = vpop.f32.mrb[0].mxu0
    %582 = vdwg.mxu0
    %583 = vst [vmem:[#allocation8] sm:$0xff] %v577
    %584 = vst [vmem:[#allocation8 + $0x8] sm:$0xff] %v580
    // Predicated region
    $region34: #{tpu_custom_call.1} parent=1 // pred_check
      _
    $region35: #{tpu_custom_call.1} parent=1 // pred_check_branch
      %586 = sbr.rel (0) target = $region37
    $region36: #{tpu_custom_call.1} parent=1 // pred_region
      %s588 = ssub.s32 256, 256
      %589 = vsyncadd [#allocation4], %s588
      %s590 = sshll.u32 [#allocation8], 4
      %s591 = int_to_ptr.vmem [resolvable:$true] %s590
      %596 = dma.vmem_to_hbm [thread:$0]  %s591, 256, %s5, [#allocation4], 128, 128, 8
    $region37: #{tpu_custom_call.1} parent=1 // pred_fallthru
      _
    // Predicated region
    $region38: #{tpu_custom_call.1} parent=1 // pred_check
      _
    $region39: #{tpu_custom_call.1} parent=1 // pred_check_branch
      %598 = sbr.rel (0) target = $region41
    $region40: #{tpu_custom_call.1} parent=1 // pred_region
      %599 = dma.done [#allocation4], 256
    $region41: #{tpu_custom_call.1} parent=1 // pred_fallthru
      _
    %600 = vsyncpa [#allocation3], 1
    %601 = vsyncpa [#allocation6], 1
    %602 = vsyncpa [#allocation4], 1

</llo_original>
